<compile_context>
chip_gen: v5e
topology: v5e:2x2
jax: 0.10.0
libtpu: 0.0.40
codegen_flags: <defaults>
</compile_context>

<pallas_src>
import math

import jax
import jax.numpy as jnp
from jax.experimental import pallas as pl
from jax.experimental.pallas import tpu as pltpu


def make_dendrite_dd_kernel(a_const: float, matmul_dtype):
    """Kernel body with the nonlinearity constants folded at trace time."""
    a = float(a_const)
    apply_dd = a > 0.0
    # Python float64: no f32 overflow of exp(a) for nonlinearity close to 1.
    inv_denom = 1.0 / (math.exp(a) - 1.0) if apply_dd else 0.0

    def kernel(x_ref, wt_ref, o_ref):
        x = x_ref[...]                                        # (TILE_N, C) f32

        # --- normalize by per-row max(|x|) over channels (dim=1) ---
        # NOTE: all-zero rows give xmax = 0 -> NaN, same as the PyTorch reference.
        xmax = jnp.max(jnp.abs(x), axis=1, keepdims=True)     # (TILE_N, 1)
        xn = x * pl.reciprocal(xmax, approx=False)

        if apply_dd:
            # --- dendritic nonlinearity: (exp(a*xn) - 1) / (exp(a) - 1) ---
            u = (jnp.exp(a * xn) - 1.0) * inv_denom           # (TILE_N, C) f32

            # --- ddNet: two rounds of y = Linear(y) * c with c = u ---
            # W was pre-transposed to (in, out) and cast to bf16 in the wrapper,
            # so this is a plain (m,k)x(k,n) MXU contraction. Accumulation is f32.
            wt = wt_ref[...]                                  # (C, C) matmul_dtype
            y = jnp.dot(u.astype(matmul_dtype), wt,
                        preferred_element_type=jnp.float32) * u
            y = jnp.dot(y.astype(matmul_dtype), wt,
                        preferred_element_type=jnp.float32) * u
        else:
            y = xn

        # --- final normalization by per-row max(|y|) over channels ---
        ymax = jnp.max(jnp.abs(y), axis=1, keepdims=True)
        o_ref[...] = (y * pl.reciprocal(ymax, approx=False)).astype(o_ref.dtype)

    return kernel


def _choose_tile_n(n: int, requested: int) -> int:
    """Fixed batch tile: multiple of 8 sublanes, >= 2 grid steps when possible."""
    if n <= 8:
        return n                        # block == full dim is always legal
    t = min(int(requested), n)
    t = min(t, (n + 1) // 2)            # guarantee grid >= 2 (v7x megacore)
    t = max(8, (t // 8) * 8)            # sublane-aligned
    return t


def dendrite_and_dd(x, w, nonlinearity: float = 0.1, tile_n: int = 1024,
                    matmul_dtype=jnp.bfloat16):
    """x: (N, C) f32, w: (C, C) f32 PyTorch Linear weight (out, in). Returns (N, C) f32."""
    N, C = x.shape
    assert w.shape == (C, C)
    a_const = 50.0 * nonlinearity / (1.0 - nonlinearity)
    kernel = make_dendrite_dd_kernel(a_const, matmul_dtype)

    # One-time XLA transpose + cast of the resident weight: (out,in) -> (in,out),
    # bf16 halves its VMEM footprint and avoids a transposed RHS inside the loop.
    wt = w.T.astype(matmul_dtype)

    tile = _choose_tile_n(N, tile_n)
    grid = (pl.cdiv(N, tile),)          # partial last block OK: rows independent,
                                        # padded rows are never written back.

    w_bytes = C * C * jnp.dtype(matmul_dtype).itemsize
    w_spec_kwargs = {}
    w_buffers = 2
    if w_bytes > (4 << 20):
        # Large resident weight (constant index_map): single-buffer it so it does
        # not occupy 2x VMEM (matters on v7x's 64 MiB VMEM when C is big).
        w_spec_kwargs["pipeline_mode"] = pl.Buffered(1)
        w_buffers = 1
    w_spec = pl.BlockSpec((C, C), lambda i: (0, 0), **w_spec_kwargs)

    # VMEM budget: double-buffered f32 x/out tiles + resident weight + slack.
    vmem_bytes = 2 * (2 * tile * C * 4) + w_buffers * w_bytes + (4 << 20)
    vmem_bytes = int(max(vmem_bytes, 16 << 20))

    cost = pl.CostEstimate(
        flops=2 * 2 * N * C * C,                    # two (N,C)x(C,C) matmuls
        transcendentals=N * C,                      # one exp per element
        bytes_accessed=2 * N * C * 4 + w_bytes,     # x in, out, weight
    )

    return pl.pallas_call(
        kernel,
        out_shape=jax.ShapeDtypeStruct((N, C), jnp.float32),
        grid=grid,
        in_specs=[
            pl.BlockSpec((tile, C), lambda i: (i, 0)),   # pipelined x tile
            w_spec,                                      # weight resident in VMEM
        ],
        out_specs=pl.BlockSpec((tile, C), lambda i: (i, 0)),
        compiler_params=pltpu.CompilerParams(
            dimension_semantics=("parallel",),           # rows are independent
            vmem_limit_bytes=vmem_bytes,
        ),
        cost_estimate=cost,
    )(x, wt)


def reference_forward(x, w, nonlinearity: float = 0.1, matmul_dtype=None):
    """Pure-JAX reference mirroring the PyTorch module.

    matmul_dtype=None   -> f32 HIGHEST-precision matmuls (PyTorch-faithful).
    matmul_dtype=bf16   -> same bf16-operand / f32-accumulate dots as the kernel.
    """
    a = 50.0 * nonlinearity / (1.0 - nonlinearity)
    inv_denom = 1.0 / (math.exp(a) - 1.0) if a > 0.0 else 0.0
    xmax = jnp.max(jnp.abs(x), axis=1, keepdims=True)
    xn = x / xmax
    if a <= 0.0:
        out = xn
    else:
        u = (jnp.exp(jnp.float32(a) * xn) - 1.0) * jnp.float32(inv_denom)
        if matmul_dtype is None:
            hp = jax.lax.Precision.HIGHEST
            y = jnp.dot(u, w.T, precision=hp) * u
            y = jnp.dot(y, w.T, precision=hp) * u
        else:
            wt = w.T.astype(matmul_dtype)
            y = jnp.dot(u.astype(matmul_dtype), wt,
                        preferred_element_type=jnp.float32) * u
            y = jnp.dot(y.astype(matmul_dtype), wt,
                        preferred_element_type=jnp.float32) * u
        out = y
    ymax = jnp.max(jnp.abs(out), axis=1, keepdims=True)
    return out / ymax


if __name__ == "__main__":
    # Small shapes consistent with the module: (batch, channels).
    # C = 128 keeps the output lane-dense; N = 256 gives a 2-step "parallel" grid
    # (tile_n is capped near N/2 so both v7x TensorCores get work).
    N, C = 256, 128
    key = jax.random.PRNGKey(0)
    kx, kw = jax.random.split(key)

    x = jax.random.normal(kx, (N, C), dtype=jnp.float32)

    # Deterministic init matching nn.Linear(C, C, bias=False) default:
    # uniform(-1/sqrt(C), 1/sqrt(C)), weight shape (out_features, in_features).
    bound = 1.0 / math.sqrt(C)
    w = jax.random.uniform(kw, (C, C), dtype=jnp.float32, minval=-bound, maxval=bound)

    out = dendrite_and_dd(x, w, nonlinearity=0.1)
    out = jax.block_until_ready(out)
    assert out.shape == (N, C)

    # Primary correctness check: same bf16-operand / f32-accumulate matmuls.
    ref_same = reference_forward(x, w, nonlinearity=0.1, matmul_dtype=jnp.bfloat16)
    assert jnp.allclose(out, ref_same, atol=2e-2, rtol=2e-2), "mismatch vs bf16 reference"

    # Sanity bound vs the f32 HIGHEST-precision (PyTorch-faithful) reference;
    # loose tolerance accounts for the intentional bf16-operand matmul precision.
    ref_hp = reference_forward(x, w, nonlinearity=0.1)
    assert jnp.allclose(out, ref_hp, atol=1e-1, rtol=1e-1), "mismatch vs f32 reference"

    print("KERNEL_OK")
</pallas_src>

<mosaic_0001>
module attributes {stable_mosaic.version = 11 : i64} {
  func.func @kernel(%arg0: i32, %arg1: memref<128x128xf32, #tpu.memory_space<vmem>>, %arg2: memref<128x128xbf16, #tpu.memory_space<vmem>>, %arg3: memref<128x128xf32, #tpu.memory_space<vmem>>) attributes {dimension_semantics = [#tpu.dimension_semantics<parallel>], iteration_bounds = array<i64: 2>, scalar_prefetch = 0 : i64, scratch_operands = 0 : i64, tpu.core_type = #tpu.core_type<tc>, window_params = [{transform_indices = @transform_0, window_bounds = array<i64: 128, 128>}, {pipeline_mode = #tpu.pipeline_mode<synchronous>, transform_indices = @transform_1, window_bounds = array<i64: 128, 128>}, {transform_indices = @transform_2, window_bounds = array<i64: 128, 128>}]} {
    %c0 = arith.constant 0 : index
    %c0_0 = arith.constant 0 : index
    %0 = vector.load %arg1[%c0, %c0_0] : memref<128x128xf32, #tpu.memory_space<vmem>>, vector<128x128xf32>
    %1 = math.absf %0 : vector<128x128xf32>
    %cst = arith.constant dense<0xFF800000> : vector<128xf32>
    %2 = vector.multi_reduction <maximumf>, %1, %cst [1] : vector<128x128xf32> to vector<128xf32>
    %3 = vector.shape_cast %2 : vector<128xf32> to vector<128x1xf32>
    %4 = tpu.reciprocal %3 : vector<128x1xf32> -> vector<128x1xf32>
    %5 = vector.broadcast %4 : vector<128x1xf32> to vector<128x128xf32>
    %6 = arith.mulf %0, %5 : vector<128x128xf32>
    %cst_1 = arith.constant 5.55555534 : f32
    %7 = vector.broadcast %cst_1 : f32 to vector<128x128xf32>
    %8 = arith.mulf %7, %6 : vector<128x128xf32>
    %9 = math.exp %8 : vector<128x128xf32>
    %cst_2 = arith.constant 1.000000e+00 : f32
    %10 = vector.broadcast %cst_2 : f32 to vector<128x128xf32>
    %11 = arith.subf %9, %10 : vector<128x128xf32>
    %cst_3 = arith.constant 0.00388092338 : f32
    %12 = vector.broadcast %cst_3 : f32 to vector<128x128xf32>
    %13 = arith.mulf %11, %12 : vector<128x128xf32>
    %c0_4 = arith.constant 0 : index
    %c0_5 = arith.constant 0 : index
    %14 = vector.load %arg2[%c0_4, %c0_5] : memref<128x128xbf16, #tpu.memory_space<vmem>>, vector<128x128xbf16>
    %15 = arith.truncf %13 : vector<128x128xf32> to vector<128x128xbf16>
    %cst_6 = arith.constant dense<0.000000e+00> : vector<128x128xf32>
    %16 = tpu.matmul %15, %14, %cst_6 {dimension_numbers = #tpu.dot_dimension_numbers<[1], [0], [0], [1], [0, 0, 1, 1], [], []>} : vector<128x128xbf16>, vector<128x128xbf16>, vector<128x128xf32> -> vector<128x128xf32>
    %17 = arith.mulf %16, %13 : vector<128x128xf32>
    %18 = arith.truncf %17 : vector<128x128xf32> to vector<128x128xbf16>
    %cst_7 = arith.constant dense<0.000000e+00> : vector<128x128xf32>
    %19 = tpu.matmul %18, %14, %cst_7 {dimension_numbers = #tpu.dot_dimension_numbers<[1], [0], [0], [1], [0, 0, 1, 1], [], []>} : vector<128x128xbf16>, vector<128x128xbf16>, vector<128x128xf32> -> vector<128x128xf32>
    %20 = arith.mulf %19, %13 : vector<128x128xf32>
    %21 = math.absf %20 : vector<128x128xf32>
    %cst_8 = arith.constant dense<0xFF800000> : vector<128xf32>
    %22 = vector.multi_reduction <maximumf>, %21, %cst_8 [1] : vector<128x128xf32> to vector<128xf32>
    %23 = vector.shape_cast %22 : vector<128xf32> to vector<128x1xf32>
    %24 = tpu.reciprocal %23 : vector<128x1xf32> -> vector<128x1xf32>
    %25 = vector.broadcast %24 : vector<128x1xf32> to vector<128x128xf32>
    %26 = arith.mulf %20, %25 : vector<128x128xf32>
    %c0_9 = arith.constant 0 : index
    %c0_10 = arith.constant 0 : index
    %27 = vector.load %arg3[%c0_9, %c0_10] : memref<128x128xf32, #tpu.memory_space<vmem>>, vector<128x128xf32>
    tpu.vector_store %arg3[%c0_9, %c0_10], %26 {strides = array<i32>} : memref<128x128xf32, #tpu.memory_space<vmem>>, vector<128x128xf32>,
    return
  }
  func.func @transform_0(%arg0: i32) -> (i32, i32) {
    %c0_i32 = arith.constant 0 : i32
    %c0_i32_0 = arith.constant 0 : i32
    return %arg0, %c0_i32 : i32, i32
  }
  func.func @transform_1(%arg0: i32) -> (i32, i32) {
    %c0_i32 = arith.constant 0 : i32
    %c0_i32_0 = arith.constant 0 : i32
    %c0_i32_1 = arith.constant 0 : i32
    return %c0_i32, %c0_i32_0 : i32, i32
  }
  func.func @transform_2(%arg0: i32) -> (i32, i32) {
    %c0_i32 = arith.constant 0 : i32
    %c0_i32_0 = arith.constant 0 : i32
    return %arg0, %c0_i32 : i32, i32
  }
}

</mosaic_0001>

<llo_original>
// kernel: tpu_custom_call.1
$region0: #{tpu_custom_call.1}
  #allocation0 [shape = 'u32[]', space=smem, size = 0x4, offset = 0x4, fixed_abs, tag = 'smem constant byte address 0x4 - core index']
  #allocation1 [shape = 'u32[72,128]{1,0:T(1,128)}', space=vmem, size = 0x9000, scoped, tag = 'internal scratch']
  %s0 = inlined_call_operand.hbm [shape: f32[256,128], index: 0, kind: input, shape index: {}]
  %s1 = inlined_call_operand.hbm [shape: bf16[128,128], index: 1, kind: input, shape index: {}]
  %s2 = inlined_call_operand.hbm [shape: f32[256,128], index: 2, kind: output, shape index: {}]
  %s3 = sld [smem:[#allocation0]]
  $region49: #{tpu_custom_call.1} parent=0
    _
  %s5 = ssub.s32 1, %s3
  %s6 = scalar_select 0, %s5, %s3
  $region1: #{tpu_custom_call.1} parent=0
    #allocation2 [shape = 'u8[131072]{0}', space=vmem, size = 0x20000, scoped, tag = 'input window, operand 0']
    #allocation3 [shape = 's32[2]{0}', space=sflag, size = 0x8, scoped, tag = 'scoped memory for tpu_custom_call.1']
    #allocation4 [shape = 's32[2]{0}', space=sflag, size = 0x8, scoped, tag = 'scoped memory for tpu_custom_call.1']
    #allocation5 [shape = 'u8[32768]{0}', space=vmem, size = 0x8000, scoped, tag = 'input window, operand 1, single buffered']
    #allocation6 [shape = 's32[1]{0}', space=sflag, size = 0x4, scoped, tag = 'scoped memory for tpu_custom_call.1']
    #allocation7 [shape = 'u8[131072]{0}', space=vmem, size = 0x20000, scoped, tag = 'output window, operand 0']
    %7 = vsyncpa [#allocation3], 0
    %s8 = scalar_lea.sflag [#allocation3], 1
    %9 = vsyncpa %s8, 0
    %10 = vsyncpa [#allocation6], 0
    %11 = vsyncpa [#allocation4], 0
    %s12 = scalar_lea.sflag [#allocation4], 1
    %13 = vsyncpa %s12, 0
    loop: start=0, step=1, limit=4
    $region2: #{tpu_custom_call.1} parent=1 // loop_pre_header
      _
    $region3: #{tpu_custom_call.1} parent=1 // loop_header
      %s15 = sphi 0, %s19
      %p16 = scmp.ge.s32.totalorder %s15, 4
      %s25 = sphi 0, %s27
      %s28 = sphi 0, %s25
      %s29 = sphi 0, %s28
      %s45 = sphi 0, %s29
      %s49 = sphi 0, %s49
      %s51 = sphi 0, %s49
      %s52 = sphi 0, %s51
      %s66 = sphi 0, %s52
      %s72 = sphi 0, %s74
      %s75 = sphi 0, %s72
      %s76 = sphi 0, %s75
      %s92 = sphi 0, %s76
    $region4: #{tpu_custom_call.1} parent=1 // loop_header_branch
      %18 = sbr.rel (%p16) target = $region8
    $region5: #{tpu_custom_call.1} parent=1 // loop_body
      %s20 = ssub.s32 %s15, 1
      %s21 = ssub.s32 %s15, 2
      %s22 = sadd.s32 %s15, 1
      %s23 = ssub.s32 %s15, %s22
      %p24 = scmp.eq.s32.totalorder %s23, 0
      %s26 = sadd.s32 %s25, 1
      %s27 = scalar_select %p24, %s25, %s26
      %p30 = pneg %p24
      %p31 = scmp.eq.s32.totalorder %s15, 1
      %p32 = por %p30, %p31
      %p33 = scmp.ne.s32.totalorder %s25, %s28
      %p34 = scmp.eq.s32.totalorder %s15, 0
      %p35 = por %p33, %p34
      %p36 = scmp.ne.s32.totalorder %s25, %s28
      %p37 = scmp.eq.s32.totalorder %s20, 1
      %p38 = por %p36, %p37
      %p39 = scmp.ne.s32.totalorder %s28, %s29
      %p40 = scmp.eq.s32.totalorder %s20, 0
      %p41 = por %p39, %p40
      %p42 = scmp.ne.s32.totalorder %s28, %s29
      %p43 = scmp.eq.s32.totalorder %s21, 1
      %p44 = por %p42, %p43
      %p46 = scmp.ne.s32.totalorder %s29, %s45
      %p47 = scmp.eq.s32.totalorder %s21, 0
      %p48 = por %p46, %p47
      %s50 = sadd.s32 %s49, 1
      %p53 = scmp.eq.s32.totalorder %s15, 1
      %p54 = scmp.ne.s32.totalorder %s49, %s51
      %p55 = scmp.eq.s32.totalorder %s15, 0
      %p56 = por %p54, %p55
      %p57 = scmp.ne.s32.totalorder %s49, %s51
      %p58 = scmp.eq.s32.totalorder %s20, 1
      %p59 = por %p57, %p58
      %p60 = scmp.ne.s32.totalorder %s51, %s52
      %p61 = scmp.eq.s32.totalorder %s20, 0
      %p62 = por %p60, %p61
      %p63 = scmp.ne.s32.totalorder %s51, %s52
      %p64 = scmp.eq.s32.totalorder %s21, 1
      %p65 = por %p63, %p64
      %p67 = scmp.ne.s32.totalorder %s52, %s66
      %p68 = scmp.eq.s32.totalorder %s21, 0
      %p69 = por %p67, %p68
      %s70 = ssub.s32 %s15, %s22
      %p71 = scmp.eq.s32.totalorder %s70, 0
      %s73 = sadd.s32 %s72, 1
      %s74 = scalar_select %p71, %s72, %s73
      %p77 = pneg %p71
      %p78 = scmp.eq.s32.totalorder %s15, 1
      %p79 = por %p77, %p78
      %p80 = scmp.ne.s32.totalorder %s72, %s75
      %p81 = scmp.eq.s32.totalorder %s15, 0
      %p82 = por %p80, %p81
      %p83 = scmp.ne.s32.totalorder %s72, %s75
      %p84 = scmp.eq.s32.totalorder %s20, 1
      %p85 = por %p83, %p84
      %p86 = scmp.ne.s32.totalorder %s75, %s76
      %p87 = scmp.eq.s32.totalorder %s20, 0
      %p88 = por %p86, %p87
      %p89 = scmp.ne.s32.totalorder %s75, %s76
      %p90 = scmp.eq.s32.totalorder %s21, 1
      %p91 = por %p89, %p90
      %p93 = scmp.ne.s32.totalorder %s76, %s92
      %p94 = scmp.eq.s32.totalorder %s21, 0
      %p95 = por %p93, %p94
      %p96 = scmp.le.s32.totalorder 1, %s15
      %p97 = scmp.lt.s32.totalorder %s15, 3
      %p98 = pnand %p96, %p97
      %p99 = pneg %p98
      // Predicated region
      $region9: #{tpu_custom_call.1} parent=5 // pred_check
        _
      $region10: #{tpu_custom_call.1} parent=5 // pred_check_branch
        %101 = sbr.rel (%p98) target = $region12
      $region11: #{tpu_custom_call.1} parent=5 // pred_region
        %s102 = ssub.s32 %s15, 1
        // Predicated region
        $region13: #{tpu_custom_call.1} parent=11 // pred_check
          %p103 = pneg %p62
        $region14: #{tpu_custom_call.1} parent=11 // pred_check_branch
          %105 = sbr.rel (%p103) target = $region16
        $region15: #{tpu_custom_call.1} parent=11 // pred_region
          %107 = vsyncadd [#allocation6], 0
          %s108 = sshll.u32 %s1, 4
          %s109 = int_to_ptr.hbm [resolvable:$true] %s108
          %s110 = sshll.u32 [#allocation5], 4
          %s111 = int_to_ptr.vmem [resolvable:$true] %s110
          %116 = dma.hbm_to_vmem [thread:$0]  %s109, 1024, %s111, [#allocation6], 64, 64, 4
        $region16: #{tpu_custom_call.1} parent=11 // pred_fallthru
          _
      $region12: #{tpu_custom_call.1} parent=5 // pred_fallthru
        _
      %p117 = scmp.lt.s32.totalorder %s15, 2
      // Predicated region
      $region17: #{tpu_custom_call.1} parent=5 // pred_check
        %p118 = pneg %p117
      $region18: #{tpu_custom_call.1} parent=5 // pred_check_branch
        %120 = sbr.rel (%p118) target = $region20
      $region19: #{tpu_custom_call.1} parent=5 // pred_region
        // Predicated region
        $region21: #{tpu_custom_call.1} parent=19 // pred_check
          %p121 = pneg %p35
        $region22: #{tpu_custom_call.1} parent=19 // pred_check_branch
          %123 = sbr.rel (%p121) target = $region24
        $region23: #{tpu_custom_call.1} parent=19 // pred_region
          %s124 = sand.u32 %s25, 1
          %s125 = scalar_lea.sflag [#allocation3], %s124
          %s126 = sand.u32 %s25, 1
          %s127 = smul.addr %s126, 128
          %s128 = scalar_lea.vmem [#allocation2], %s127
          %s129 = smul.u32 16, %s15
          %131 = vsyncadd %s125, 0
          %s132 = smul.addr %s129, 8
          %s133 = scalar_lea.hbm %s0, %s132
          %s134 = sshll.u32 %s133, 4
          %s135 = int_to_ptr.hbm [resolvable:$true] %s134
          %s136 = sshll.u32 %s128, 4
          %s137 = int_to_ptr.vmem [resolvable:$true] %s136
          %142 = dma.hbm_to_vmem [thread:$0]  %s135, 2048, %s137, %s125, 128, 128, 8
        $region24: #{tpu_custom_call.1} parent=19 // pred_fallthru
          _
      $region20: #{tpu_custom_call.1} parent=5 // pred_fallthru
        _
      %p143 = scmp.le.s32.totalorder 1, %s15
      %p144 = scmp.lt.s32.totalorder %s15, 3
      %p145 = pnand %p143, %p144
      %p146 = pneg %p145
      // Predicated region
      $region25: #{tpu_custom_call.1} parent=5 // pred_check
        _
      $region26: #{tpu_custom_call.1} parent=5 // pred_check_branch
        %148 = sbr.rel (%p145) target = $region28
      $region27: #{tpu_custom_call.1} parent=5 // pred_region
        %s149 = ssub.s32 %s15, 1
        %s150 = sand.u32 %s28, 1
        %s151 = scalar_lea.sflag [#allocation3], %s150
        %s152 = sand.u32 %s28, 1
        %s153 = smul.addr %s152, 128
        %s154 = scalar_lea.vmem [#allocation2], %s153
        // Predicated region
        $region29: #{tpu_custom_call.1} parent=27 // pred_check
          %p155 = pneg %p41
        $region30: #{tpu_custom_call.1} parent=27 // pred_check_branch
          %157 = sbr.rel (%p155) target = $region32
        $region31: #{tpu_custom_call.1} parent=27 // pred_region
          %159 = dma.done %s151, 2048
        $region32: #{tpu_custom_call.1} parent=27 // pred_fallthru
          _
        // Predicated region
        $region33: #{tpu_custom_call.1} parent=27 // pred_check
          %p160 = pneg %p62
        $region34: #{tpu_custom_call.1} parent=27 // pred_check_branch
          %162 = sbr.rel (%p160) target = $region36
        $region35: #{tpu_custom_call.1} parent=27 // pred_region
          %164 = dma.done [#allocation6], 1024
        $region36: #{tpu_custom_call.1} parent=27 // pred_fallthru
          _
        %s165 = sand.u32 %s28, 1
        %s166 = scalar_lea.sflag [#allocation3], %s165
        %s167 = sand.u32 %s28, 1
        %s168 = smul.addr %s167, 128
        %s169 = scalar_lea.vmem [#allocation2], %s168
        %p170 = pneg %p41
        %p171 = pneg %p38
        %p172 = pneg %p62
        %p173 = pneg %p59
        %p174 = pneg %p88
        %p175 = pneg %p85
        %s176 = sand.u32 %s75, 1
        %s177 = scalar_lea.sflag [#allocation4], %s176
        %s178 = sand.u32 %s75, 1
        %s179 = smul.addr %s178, 128
        %s180 = scalar_lea.vmem [#allocation7], %s179
        %s181 = smul.u32 16, %s20
        %s182 = smul.u32 16, %s20
        %v183 = vld [vmem:[%s154] sm:$0xff]
        %v184 = vld [vmem:[%s154 + $0x8] sm:$0xff]
        %v185 = vld [vmem:[%s154 + $0x10] sm:$0xff]
        %v186 = vld [vmem:[%s154 + $0x18] sm:$0xff]
        %v187 = vld [vmem:[%s154 + $0x20] sm:$0xff]
        %v188 = vld [vmem:[%s154 + $0x28] sm:$0xff]
        %v189 = vld [vmem:[%s154 + $0x30] sm:$0xff]
        %v190 = vld [vmem:[%s154 + $0x38] sm:$0xff]
        %v191 = vld [vmem:[%s154 + $0x40] sm:$0xff]
        %v192 = vld [vmem:[%s154 + $0x48] sm:$0xff]
        %v193 = vld [vmem:[%s154 + $0x50] sm:$0xff]
        %v194 = vld [vmem:[%s154 + $0x58] sm:$0xff]
        %v195 = vld [vmem:[%s154 + $0x60] sm:$0xff]
        %v196 = vld [vmem:[%s154 + $0x68] sm:$0xff]
        %v197 = vld [vmem:[%s154 + $0x70] sm:$0xff]
        %v198 = vld [vmem:[%s154 + $0x78] sm:$0xff]
        %v199 = vand.u32 2147483647, %v183
        %v200 = vand.u32 2147483647, %v184
        %v201 = vand.u32 2147483647, %v185
        %v202 = vand.u32 2147483647, %v186
        %v203 = vand.u32 2147483647, %v187
        %v204 = vand.u32 2147483647, %v188
        %v205 = vand.u32 2147483647, %v189
        %v206 = vand.u32 2147483647, %v190
        %v207 = vand.u32 2147483647, %v191
        %v208 = vand.u32 2147483647, %v192
        %v209 = vand.u32 2147483647, %v193
        %v210 = vand.u32 2147483647, %v194
        %v211 = vand.u32 2147483647, %v195
        %v212 = vand.u32 2147483647, %v196
        %v213 = vand.u32 2147483647, %v197
        %v214 = vand.u32 2147483647, %v198
        %215 = vmax.xlane.f32.xlu0 %v199
        %v216 = vpop.xlane.xlu0 %215
        %217 = vmax.xlane.f32.xlu0 %v200
        %v218 = vpop.xlane.xlu0 %217
        %219 = vmax.xlane.f32.xlu0 %v201
        %v220 = vpop.xlane.xlu0 %219
        %221 = vmax.xlane.f32.xlu0 %v202
        %v222 = vpop.xlane.xlu0 %221
        %223 = vmax.xlane.f32.xlu0 %v203
        %v224 = vpop.xlane.xlu0 %223
        %225 = vmax.xlane.f32.xlu0 %v204
        %v226 = vpop.xlane.xlu0 %225
        %227 = vmax.xlane.f32.xlu0 %v205
        %v228 = vpop.xlane.xlu0 %227
        %229 = vmax.xlane.f32.xlu0 %v206
        %v230 = vpop.xlane.xlu0 %229
        %231 = vmax.xlane.f32.xlu0 %v207
        %v232 = vpop.xlane.xlu0 %231
        %233 = vmax.xlane.f32.xlu0 %v208
        %v234 = vpop.xlane.xlu0 %233
        %235 = vmax.xlane.f32.xlu0 %v209
        %v236 = vpop.xlane.xlu0 %235
        %237 = vmax.xlane.f32.xlu0 %v210
        %v238 = vpop.xlane.xlu0 %237
        %239 = vmax.xlane.f32.xlu0 %v211
        %v240 = vpop.xlane.xlu0 %239
        %241 = vmax.xlane.f32.xlu0 %v212
        %v242 = vpop.xlane.xlu0 %241
        %243 = vmax.xlane.f32.xlu0 %v213
        %v244 = vpop.xlane.xlu0 %243
        %245 = vmax.xlane.f32.xlu0 %v214
        %v246 = vpop.xlane.xlu0 %245
        %v247 = vrcp.pop %v216
        %v248 = vmul.f32 %v216, %v247
        %v249 = vsub.f32 1.0, %v248
        %v250 = vmul.f32 %v247, %v249
        %v251 = vadd.f32 %v247, %v250
        %vm252 = vweird.f32 %v216
        %vm253 = vweird.f32 %v247
        %vm254 = vmor %vm252, %vm253
        %v255 = vsel %vm254, %v247, %v251
        %v256 = vand.u32 2147483647, %v216
        %vm257 = vcmp.eq.f32.partialorder %v256, 8.507059e+37
        %v258 = vand.u32 %v216, 2147483648
        %v259 = vor.u32 1.1754944e-38, %v258
        %v260 = vsel %vm257, %v259, %v255
        %v261 = vrcp.pop %v218
        %v262 = vmul.f32 %v218, %v261
        %v263 = vsub.f32 1.0, %v262
        %v264 = vmul.f32 %v261, %v263
        %v265 = vadd.f32 %v261, %v264
        %vm266 = vweird.f32 %v218
        %vm267 = vweird.f32 %v261
        %vm268 = vmor %vm266, %vm267
        %v269 = vsel %vm268, %v261, %v265
        %v270 = vand.u32 2147483647, %v218
        %vm271 = vcmp.eq.f32.partialorder %v270, 8.507059e+37
        %v272 = vand.u32 %v218, 2147483648
        %v273 = vor.u32 1.1754944e-38, %v272
        %v274 = vsel %vm271, %v273, %v269
        %v275 = vrcp.pop %v220
        %v276 = vmul.f32 %v220, %v275
        %v277 = vsub.f32 1.0, %v276
        %v278 = vmul.f32 %v275, %v277
        %v279 = vadd.f32 %v275, %v278
        %vm280 = vweird.f32 %v220
        %vm281 = vweird.f32 %v275
        %vm282 = vmor %vm280, %vm281
        %v283 = vsel %vm282, %v275, %v279
        %v284 = vand.u32 2147483647, %v220
        %vm285 = vcmp.eq.f32.partialorder %v284, 8.507059e+37
        %v286 = vand.u32 %v220, 2147483648
        %v287 = vor.u32 1.1754944e-38, %v286
        %v288 = vsel %vm285, %v287, %v283
        %v289 = vrcp.pop %v222
        %v290 = vmul.f32 %v222, %v289
        %v291 = vsub.f32 1.0, %v290
        %v292 = vmul.f32 %v289, %v291
        %v293 = vadd.f32 %v289, %v292
        %vm294 = vweird.f32 %v222
        %vm295 = vweird.f32 %v289
        %vm296 = vmor %vm294, %vm295
        %v297 = vsel %vm296, %v289, %v293
        %v298 = vand.u32 2147483647, %v222
        %vm299 = vcmp.eq.f32.partialorder %v298, 8.507059e+37
        %v300 = vand.u32 %v222, 2147483648
        %v301 = vor.u32 1.1754944e-38, %v300
        %v302 = vsel %vm299, %v301, %v297
        %v303 = vrcp.pop %v224
        %v304 = vmul.f32 %v224, %v303
        %v305 = vsub.f32 1.0, %v304
        %v306 = vmul.f32 %v303, %v305
        %v307 = vadd.f32 %v303, %v306
        %vm308 = vweird.f32 %v224
        %vm309 = vweird.f32 %v303
        %vm310 = vmor %vm308, %vm309
        %v311 = vsel %vm310, %v303, %v307
        %v312 = vand.u32 2147483647, %v224
        %vm313 = vcmp.eq.f32.partialorder %v312, 8.507059e+37
        %v314 = vand.u32 %v224, 2147483648
        %v315 = vor.u32 1.1754944e-38, %v314
        %v316 = vsel %vm313, %v315, %v311
        %v317 = vrcp.pop %v226
        %v318 = vmul.f32 %v226, %v317
        %v319 = vsub.f32 1.0, %v318
        %v320 = vmul.f32 %v317, %v319
        %v321 = vadd.f32 %v317, %v320
        %vm322 = vweird.f32 %v226
        %vm323 = vweird.f32 %v317
        %vm324 = vmor %vm322, %vm323
        %v325 = vsel %vm324, %v317, %v321
        %v326 = vand.u32 2147483647, %v226
        %vm327 = vcmp.eq.f32.partialorder %v326, 8.507059e+37
        %v328 = vand.u32 %v226, 2147483648
        %v329 = vor.u32 1.1754944e-38, %v328
        %v330 = vsel %vm327, %v329, %v325
        %v331 = vrcp.pop %v228
        %v332 = vmul.f32 %v228, %v331
        %v333 = vsub.f32 1.0, %v332
        %v334 = vmul.f32 %v331, %v333
        %v335 = vadd.f32 %v331, %v334
        %vm336 = vweird.f32 %v228
        %vm337 = vweird.f32 %v331
        %vm338 = vmor %vm336, %vm337
        %v339 = vsel %vm338, %v331, %v335
        %v340 = vand.u32 2147483647, %v228
        %vm341 = vcmp.eq.f32.partialorder %v340, 8.507059e+37
        %v342 = vand.u32 %v228, 2147483648
        %v343 = vor.u32 1.1754944e-38, %v342
        %v344 = vsel %vm341, %v343, %v339
        %v345 = vrcp.pop %v230
        %v346 = vmul.f32 %v230, %v345
        %v347 = vsub.f32 1.0, %v346
        %v348 = vmul.f32 %v345, %v347
        %v349 = vadd.f32 %v345, %v348
        %vm350 = vweird.f32 %v230
        %vm351 = vweird.f32 %v345
        %vm352 = vmor %vm350, %vm351
        %v353 = vsel %vm352, %v345, %v349
        %v354 = vand.u32 2147483647, %v230
        %vm355 = vcmp.eq.f32.partialorder %v354, 8.507059e+37
        %v356 = vand.u32 %v230, 2147483648
        %v357 = vor.u32 1.1754944e-38, %v356
        %v358 = vsel %vm355, %v357, %v353
        %v359 = vrcp.pop %v232
        %v360 = vmul.f32 %v232, %v359
        %v361 = vsub.f32 1.0, %v360
        %v362 = vmul.f32 %v359, %v361
        %v363 = vadd.f32 %v359, %v362
        %vm364 = vweird.f32 %v232
        %vm365 = vweird.f32 %v359
        %vm366 = vmor %vm364, %vm365
        %v367 = vsel %vm366, %v359, %v363
        %v368 = vand.u32 2147483647, %v232
        %vm369 = vcmp.eq.f32.partialorder %v368, 8.507059e+37
        %v370 = vand.u32 %v232, 2147483648
        %v371 = vor.u32 1.1754944e-38, %v370
        %v372 = vsel %vm369, %v371, %v367
        %v373 = vrcp.pop %v234
        %v374 = vmul.f32 %v234, %v373
        %v375 = vsub.f32 1.0, %v374
        %v376 = vmul.f32 %v373, %v375
        %v377 = vadd.f32 %v373, %v376
        %vm378 = vweird.f32 %v234
        %vm379 = vweird.f32 %v373
        %vm380 = vmor %vm378, %vm379
        %v381 = vsel %vm380, %v373, %v377
        %v382 = vand.u32 2147483647, %v234
        %vm383 = vcmp.eq.f32.partialorder %v382, 8.507059e+37
        %v384 = vand.u32 %v234, 2147483648
        %v385 = vor.u32 1.1754944e-38, %v384
        %v386 = vsel %vm383, %v385, %v381
        %v387 = vrcp.pop %v236
        %v388 = vmul.f32 %v236, %v387
        %v389 = vsub.f32 1.0, %v388
        %v390 = vmul.f32 %v387, %v389
        %v391 = vadd.f32 %v387, %v390
        %vm392 = vweird.f32 %v236
        %vm393 = vweird.f32 %v387
        %vm394 = vmor %vm392, %vm393
        %v395 = vsel %vm394, %v387, %v391
        %v396 = vand.u32 2147483647, %v236
        %vm397 = vcmp.eq.f32.partialorder %v396, 8.507059e+37
        %v398 = vand.u32 %v236, 2147483648
        %v399 = vor.u32 1.1754944e-38, %v398
        %v400 = vsel %vm397, %v399, %v395
        %v401 = vrcp.pop %v238
        %v402 = vmul.f32 %v238, %v401
        %v403 = vsub.f32 1.0, %v402
        %v404 = vmul.f32 %v401, %v403
        %v405 = vadd.f32 %v401, %v404
        %vm406 = vweird.f32 %v238
        %vm407 = vweird.f32 %v401
        %vm408 = vmor %vm406, %vm407
        %v409 = vsel %vm408, %v401, %v405
        %v410 = vand.u32 2147483647, %v238
        %vm411 = vcmp.eq.f32.partialorder %v410, 8.507059e+37
        %v412 = vand.u32 %v238, 2147483648
        %v413 = vor.u32 1.1754944e-38, %v412
        %v414 = vsel %vm411, %v413, %v409
        %v415 = vrcp.pop %v240
        %v416 = vmul.f32 %v240, %v415
        %v417 = vsub.f32 1.0, %v416
        %v418 = vmul.f32 %v415, %v417
        %v419 = vadd.f32 %v415, %v418
        %vm420 = vweird.f32 %v240
        %vm421 = vweird.f32 %v415
        %vm422 = vmor %vm420, %vm421
        %v423 = vsel %vm422, %v415, %v419
        %v424 = vand.u32 2147483647, %v240
        %vm425 = vcmp.eq.f32.partialorder %v424, 8.507059e+37
        %v426 = vand.u32 %v240, 2147483648
        %v427 = vor.u32 1.1754944e-38, %v426
        %v428 = vsel %vm425, %v427, %v423
        %v429 = vrcp.pop %v242
        %v430 = vmul.f32 %v242, %v429
        %v431 = vsub.f32 1.0, %v430
        %v432 = vmul.f32 %v429, %v431
        %v433 = vadd.f32 %v429, %v432
        %vm434 = vweird.f32 %v242
        %vm435 = vweird.f32 %v429
        %vm436 = vmor %vm434, %vm435
        %v437 = vsel %vm436, %v429, %v433
        %v438 = vand.u32 2147483647, %v242
        %vm439 = vcmp.eq.f32.partialorder %v438, 8.507059e+37
        %v440 = vand.u32 %v242, 2147483648
        %v441 = vor.u32 1.1754944e-38, %v440
        %v442 = vsel %vm439, %v441, %v437
        %v443 = vrcp.pop %v244
        %v444 = vmul.f32 %v244, %v443
        %v445 = vsub.f32 1.0, %v444
        %v446 = vmul.f32 %v443, %v445
        %v447 = vadd.f32 %v443, %v446
        %vm448 = vweird.f32 %v244
        %vm449 = vweird.f32 %v443
        %vm450 = vmor %vm448, %vm449
        %v451 = vsel %vm450, %v443, %v447
        %v452 = vand.u32 2147483647, %v244
        %vm453 = vcmp.eq.f32.partialorder %v452, 8.507059e+37
        %v454 = vand.u32 %v244, 2147483648
        %v455 = vor.u32 1.1754944e-38, %v454
        %v456 = vsel %vm453, %v455, %v451
        %v457 = vrcp.pop %v246
        %v458 = vmul.f32 %v246, %v457
        %v459 = vsub.f32 1.0, %v458
        %v460 = vmul.f32 %v457, %v459
        %v461 = vadd.f32 %v457, %v460
        %vm462 = vweird.f32 %v246
        %vm463 = vweird.f32 %v457
        %vm464 = vmor %vm462, %vm463
        %v465 = vsel %vm464, %v457, %v461
        %v466 = vand.u32 2147483647, %v246
        %vm467 = vcmp.eq.f32.partialorder %v466, 8.507059e+37
        %v468 = vand.u32 %v246, 2147483648
        %v469 = vor.u32 1.1754944e-38, %v468
        %v470 = vsel %vm467, %v469, %v465
        %v471 = vmul.f32 %v183, %v260
        %v472 = vmul.f32 %v184, %v274
        %v473 = vmul.f32 %v185, %v288
        %v474 = vmul.f32 %v186, %v302
        %v475 = vmul.f32 %v187, %v316
        %v476 = vmul.f32 %v188, %v330
        %v477 = vmul.f32 %v189, %v344
        %v478 = vmul.f32 %v190, %v358
        %v479 = vmul.f32 %v191, %v372
        %v480 = vmul.f32 %v192, %v386
        %v481 = vmul.f32 %v193, %v400
        %v482 = vmul.f32 %v194, %v414
        %v483 = vmul.f32 %v195, %v428
        %v484 = vmul.f32 %v196, %v442
        %v485 = vmul.f32 %v197, %v456
        %v486 = vmul.f32 %v198, %v470
        %v487 = vmul.f32 %v471, 5.5555553
        %v488 = vmul.f32 %v472, 5.5555553
        %v489 = vmul.f32 %v473, 5.5555553
        %v490 = vmul.f32 %v474, 5.5555553
        %v491 = vmul.f32 %v475, 5.5555553
        %v492 = vmul.f32 %v476, 5.5555553
        %v493 = vmul.f32 %v477, 5.5555553
        %v494 = vmul.f32 %v478, 5.5555553
        %v495 = vmul.f32 %v479, 5.5555553
        %v496 = vmul.f32 %v480, 5.5555553
        %v497 = vmul.f32 %v481, 5.5555553
        %v498 = vmul.f32 %v482, 5.5555553
        %v499 = vmul.f32 %v483, 5.5555553
        %v500 = vmul.f32 %v484, 5.5555553
        %v501 = vmul.f32 %v485, 5.5555553
        %v502 = vmul.f32 %v486, 5.5555553
        %v503 = vmul.f32 %v487, 1.442695
        %v504 = vpow.pop %v503
        %v505 = vmul.f32 %v488, 1.442695
        %v506 = vpow.pop %v505
        %v507 = vmul.f32 %v489, 1.442695
        %v508 = vpow.pop %v507
        %v509 = vmul.f32 %v490, 1.442695
        %v510 = vpow.pop %v509
        %v511 = vmul.f32 %v491, 1.442695
        %v512 = vpow.pop %v511
        %v513 = vmul.f32 %v492, 1.442695
        %v514 = vpow.pop %v513
        %v515 = vmul.f32 %v493, 1.442695
        %v516 = vpow.pop %v515
        %v517 = vmul.f32 %v494, 1.442695
        %v518 = vpow.pop %v517
        %v519 = vmul.f32 %v495, 1.442695
        %v520 = vpow.pop %v519
        %v521 = vmul.f32 %v496, 1.442695
        %v522 = vpow.pop %v521
        %v523 = vmul.f32 %v497, 1.442695
        %v524 = vpow.pop %v523
        %v525 = vmul.f32 %v498, 1.442695
        %v526 = vpow.pop %v525
        %v527 = vmul.f32 %v499, 1.442695
        %v528 = vpow.pop %v527
        %v529 = vmul.f32 %v500, 1.442695
        %v530 = vpow.pop %v529
        %v531 = vmul.f32 %v501, 1.442695
        %v532 = vpow.pop %v531
        %v533 = vmul.f32 %v502, 1.442695
        %v534 = vpow.pop %v533
        %v535 = vsub.f32 %v504, 1.0
        %v536 = vsub.f32 %v506, 1.0
        %v537 = vsub.f32 %v508, 1.0
        %v538 = vsub.f32 %v510, 1.0
        %v539 = vsub.f32 %v512, 1.0
        %v540 = vsub.f32 %v514, 1.0
        %v541 = vsub.f32 %v516, 1.0
        %v542 = vsub.f32 %v518, 1.0
        %v543 = vsub.f32 %v520, 1.0
        %v544 = vsub.f32 %v522, 1.0
        %v545 = vsub.f32 %v524, 1.0
        %v546 = vsub.f32 %v526, 1.0
        %v547 = vsub.f32 %v528, 1.0
        %v548 = vsub.f32 %v530, 1.0
        %v549 = vsub.f32 %v532, 1.0
        %v550 = vsub.f32 %v534, 1.0
        %v551 = vmul.f32 %v535, 0.0038809234
        %v552 = vmul.f32 %v536, 0.0038809234
        %v553 = vmul.f32 %v537, 0.0038809234
        %v554 = vmul.f32 %v538, 0.0038809234
        %v555 = vmul.f32 %v539, 0.0038809234
        %v556 = vmul.f32 %v540, 0.0038809234
        %v557 = vmul.f32 %v541, 0.0038809234
        %v558 = vmul.f32 %v542, 0.0038809234
        %v559 = vmul.f32 %v543, 0.0038809234
        %v560 = vmul.f32 %v544, 0.0038809234
        %v561 = vmul.f32 %v545, 0.0038809234
        %v562 = vmul.f32 %v546, 0.0038809234
        %v563 = vmul.f32 %v547, 0.0038809234
        %v564 = vmul.f32 %v548, 0.0038809234
        %v565 = vmul.f32 %v549, 0.0038809234
        %v566 = vmul.f32 %v550, 0.0038809234
        %v567 = vld [vmem:[#allocation5] sm:$0xf]
        %v568 = vld [vmem:[#allocation5 + $0x4] sm:$0xf]
        %v569 = vld [vmem:[#allocation5 + $0x8] sm:$0xf]
        %v570 = vld [vmem:[#allocation5 + $0xc] sm:$0xf]
        %v571 = vld [vmem:[#allocation5 + $0x10] sm:$0xf]
        %v572 = vld [vmem:[#allocation5 + $0x14] sm:$0xf]
        %v573 = vld [vmem:[#allocation5 + $0x18] sm:$0xf]
        %v574 = vld [vmem:[#allocation5 + $0x1c] sm:$0xf]
        %v575 = vld [vmem:[#allocation5 + $0x20] sm:$0xf]
        %v576 = vld [vmem:[#allocation5 + $0x24] sm:$0xf]
        %v577 = vld [vmem:[#allocation5 + $0x28] sm:$0xf]
        %v578 = vld [vmem:[#allocation5 + $0x2c] sm:$0xf]
        %v579 = vld [vmem:[#allocation5 + $0x30] sm:$0xf]
        %v580 = vld [vmem:[#allocation5 + $0x34] sm:$0xf]
        %v581 = vld [vmem:[#allocation5 + $0x38] sm:$0xf]
        %v582 = vld [vmem:[#allocation5 + $0x3c] sm:$0xf]
        %v583 = vpack.c.bf16 %v552, %v551
        %v584 = vpack.c.bf16 %v554, %v553
        %v585 = vpack.c.bf16 %v556, %v555
        %v586 = vpack.c.bf16 %v558, %v557
        %v587 = vpack.c.bf16 %v560, %v559
        %v588 = vpack.c.bf16 %v562, %v561
        %v589 = vpack.c.bf16 %v564, %v563
        %v590 = vpack.c.bf16 %v566, %v565
        %v607 = vunpack.c.l.b16 %v567
        %v608 = vunpack.c.l.b16 %v568
        %v609 = vunpack.c.l.b16 %v569
        %v610 = vunpack.c.l.b16 %v570
        %v611 = vunpack.c.l.b16 %v571
        %v612 = vunpack.c.l.b16 %v572
        %v613 = vunpack.c.l.b16 %v573
        %v614 = vunpack.c.l.b16 %v574
        %v615 = vunpack.c.l.b16 %v575
        %v616 = vunpack.c.l.b16 %v576
        %v617 = vunpack.c.l.b16 %v577
        %v618 = vunpack.c.l.b16 %v578
        %v619 = vunpack.c.l.b16 %v579
        %v620 = vunpack.c.l.b16 %v580
        %v621 = vunpack.c.l.b16 %v581
        %v622 = vunpack.c.l.b16 %v582
        %v623 = vpack.c.b16 %v608, %v607
        %v624 = vpack.c.b16 %v610, %v609
        %v625 = vpack.c.b16 %v612, %v611
        %v626 = vpack.c.b16 %v614, %v613
        %v627 = vpack.c.b16 %v616, %v615
        %v628 = vpack.c.b16 %v618, %v617
        %v629 = vpack.c.b16 %v620, %v619
        %v630 = vpack.c.b16 %v622, %v621
        %639 = vmatpush.bf16.msra.mxu0 %v630
        %640 = vmatpush.bf16.msra.mxu0 %v629
        %641 = vmatpush.bf16.msra.mxu0 %v628
        %642 = vmatpush.bf16.msra.mxu0 %v627
        %643 = vmatpush.bf16.msra.mxu0 %v626
        %644 = vmatpush.bf16.msra.mxu0 %v625
        %645 = vmatpush.bf16.msra.mxu0 %v624
        %646 = vmatpush.bf16.msra.mxu0 %v623
        %647 = vmatmul.bf16.gmra.mxu0 %v583
        %v648 = vpop.f32.mrf.mxu0
        %v649 = vadd.f32 0.0, %v648
        %v650 = vpop.f32.mrf.mxu0
        %v651 = vadd.f32 0.0, %v650
        %652 = vmatmul.bf16.gmra.mxu0 %v584
        %v653 = vpop.f32.mrf.mxu0
        %v654 = vadd.f32 0.0, %v653
        %v655 = vpop.f32.mrf.mxu0
        %v656 = vadd.f32 0.0, %v655
        %657 = vmatmul.bf16.gmra.mxu0 %v585
        %v658 = vpop.f32.mrf.mxu0
        %v659 = vadd.f32 0.0, %v658
        %v660 = vpop.f32.mrf.mxu0
        %v661 = vadd.f32 0.0, %v660
        %662 = vmatmul.bf16.gmra.mxu0 %v586
        %v663 = vpop.f32.mrf.mxu0
        %v664 = vadd.f32 0.0, %v663
        %v665 = vpop.f32.mrf.mxu0
        %v666 = vadd.f32 0.0, %v665
        %667 = vmatmul.bf16.gmra.mxu0 %v587
        %v668 = vpop.f32.mrf.mxu0
        %v669 = vadd.f32 0.0, %v668
        %v670 = vpop.f32.mrf.mxu0
        %v671 = vadd.f32 0.0, %v670
        %672 = vmatmul.bf16.gmra.mxu0 %v588
        %v673 = vpop.f32.mrf.mxu0
        %v674 = vadd.f32 0.0, %v673
        %v675 = vpop.f32.mrf.mxu0
        %v676 = vadd.f32 0.0, %v675
        %677 = vmatmul.bf16.gmra.mxu0 %v589
        %v678 = vpop.f32.mrf.mxu0
        %v679 = vadd.f32 0.0, %v678
        %v680 = vpop.f32.mrf.mxu0
        %v681 = vadd.f32 0.0, %v680
        %682 = vmatmul.bf16.gmra.mxu0 %v590
        %v683 = vpop.f32.mrf.mxu0
        %v684 = vadd.f32 0.0, %v683
        %v685 = vpop.f32.mrf.mxu0
        %v686 = vadd.f32 0.0, %v685
        %687 = vdwg.mxu0
        %v688 = vmul.f32 %v649, %v551
        %v689 = vmul.f32 %v651, %v552
        %v690 = vmul.f32 %v654, %v553
        %v691 = vmul.f32 %v656, %v554
        %v692 = vmul.f32 %v659, %v555
        %v693 = vmul.f32 %v661, %v556
        %v694 = vmul.f32 %v664, %v557
        %v695 = vmul.f32 %v666, %v558
        %v696 = vmul.f32 %v669, %v559
        %v697 = vmul.f32 %v671, %v560
        %v698 = vmul.f32 %v674, %v561
        %v699 = vmul.f32 %v676, %v562
        %v700 = vmul.f32 %v679, %v563
        %v701 = vmul.f32 %v681, %v564
        %v702 = vmul.f32 %v684, %v565
        %v703 = vmul.f32 %v686, %v566
        %v704 = vpack.c.bf16 %v689, %v688
        %v705 = vpack.c.bf16 %v691, %v690
        %v706 = vpack.c.bf16 %v693, %v692
        %v707 = vpack.c.bf16 %v695, %v694
        %v708 = vpack.c.bf16 %v697, %v696
        %v709 = vpack.c.bf16 %v699, %v698
        %v710 = vpack.c.bf16 %v701, %v700
        %v711 = vpack.c.bf16 %v703, %v702
        %712 = vmatpush.bf16.msra.mxu0 %v630
        %713 = vmatpush.bf16.msra.mxu0 %v629
        %714 = vmatpush.bf16.msra.mxu0 %v628
        %715 = vmatpush.bf16.msra.mxu0 %v627
        %716 = vmatpush.bf16.msra.mxu0 %v626
        %717 = vmatpush.bf16.msra.mxu0 %v625
        %718 = vmatpush.bf16.msra.mxu0 %v624
        %719 = vmatpush.bf16.msra.mxu0 %v623
        %720 = vmatmul.bf16.gmra.mxu0 %v704
        %v721 = vpop.f32.mrf.mxu0
        %v722 = vadd.f32 0.0, %v721
        %v723 = vpop.f32.mrf.mxu0
        %v724 = vadd.f32 0.0, %v723
        %725 = vmatmul.bf16.gmra.mxu0 %v705
        %v726 = vpop.f32.mrf.mxu0
        %v727 = vadd.f32 0.0, %v726
        %v728 = vpop.f32.mrf.mxu0
        %v729 = vadd.f32 0.0, %v728
        %730 = vmatmul.bf16.gmra.mxu0 %v706
        %v731 = vpop.f32.mrf.mxu0
        %v732 = vadd.f32 0.0, %v731
        %v733 = vpop.f32.mrf.mxu0
        %v734 = vadd.f32 0.0, %v733
        %735 = vmatmul.bf16.gmra.mxu0 %v707
        %v736 = vpop.f32.mrf.mxu0
        %v737 = vadd.f32 0.0, %v736
        %v738 = vpop.f32.mrf.mxu0
        %v739 = vadd.f32 0.0, %v738
        %740 = vmatmul.bf16.gmra.mxu0 %v708
        %v741 = vpop.f32.mrf.mxu0
        %v742 = vadd.f32 0.0, %v741
        %v743 = vpop.f32.mrf.mxu0
        %v744 = vadd.f32 0.0, %v743
        %745 = vmatmul.bf16.gmra.mxu0 %v709
        %v746 = vpop.f32.mrf.mxu0
        %v747 = vadd.f32 0.0, %v746
        %v748 = vpop.f32.mrf.mxu0
        %v749 = vadd.f32 0.0, %v748
        %750 = vmatmul.bf16.gmra.mxu0 %v710
        %v751 = vpop.f32.mrf.mxu0
        %v752 = vadd.f32 0.0, %v751
        %v753 = vpop.f32.mrf.mxu0
        %v754 = vadd.f32 0.0, %v753
        %755 = vmatmul.bf16.gmra.mxu0 %v711
        %v756 = vpop.f32.mrf.mxu0
        %v757 = vadd.f32 0.0, %v756
        %v758 = vpop.f32.mrf.mxu0
        %v759 = vadd.f32 0.0, %v758
        %760 = vdwg.mxu0
        %v761 = vmul.f32 %v722, %v551
        %v762 = vmul.f32 %v724, %v552
        %v763 = vmul.f32 %v727, %v553
        %v764 = vmul.f32 %v729, %v554
        %v765 = vmul.f32 %v732, %v555
        %v766 = vmul.f32 %v734, %v556
        %v767 = vmul.f32 %v737, %v557
        %v768 = vmul.f32 %v739, %v558
        %v769 = vmul.f32 %v742, %v559
        %v770 = vmul.f32 %v744, %v560
        %v771 = vmul.f32 %v747, %v561
        %v772 = vmul.f32 %v749, %v562
        %v773 = vmul.f32 %v752, %v563
        %v774 = vmul.f32 %v754, %v564
        %v775 = vmul.f32 %v757, %v565
        %v776 = vmul.f32 %v759, %v566
        %v777 = vand.u32 2147483647, %v761
        %v778 = vand.u32 2147483647, %v762
        %v779 = vand.u32 2147483647, %v763
        %v780 = vand.u32 2147483647, %v764
        %v781 = vand.u32 2147483647, %v765
        %v782 = vand.u32 2147483647, %v766
        %v783 = vand.u32 2147483647, %v767
        %v784 = vand.u32 2147483647, %v768
        %v785 = vand.u32 2147483647, %v769
        %v786 = vand.u32 2147483647, %v770
        %v787 = vand.u32 2147483647, %v771
        %v788 = vand.u32 2147483647, %v772
        %v789 = vand.u32 2147483647, %v773
        %v790 = vand.u32 2147483647, %v774
        %v791 = vand.u32 2147483647, %v775
        %v792 = vand.u32 2147483647, %v776
        %793 = vmax.xlane.f32.xlu0 %v777
        %v794 = vpop.xlane.xlu0 %793
        %795 = vmax.xlane.f32.xlu0 %v778
        %v796 = vpop.xlane.xlu0 %795
        %797 = vmax.xlane.f32.xlu0 %v779
        %v798 = vpop.xlane.xlu0 %797
        %799 = vmax.xlane.f32.xlu0 %v780
        %v800 = vpop.xlane.xlu0 %799
        %801 = vmax.xlane.f32.xlu0 %v781
        %v802 = vpop.xlane.xlu0 %801
        %803 = vmax.xlane.f32.xlu0 %v782
        %v804 = vpop.xlane.xlu0 %803
        %805 = vmax.xlane.f32.xlu0 %v783
        %v806 = vpop.xlane.xlu0 %805
        %807 = vmax.xlane.f32.xlu0 %v784
        %v808 = vpop.xlane.xlu0 %807
        %809 = vmax.xlane.f32.xlu0 %v785
        %v810 = vpop.xlane.xlu0 %809
        %811 = vmax.xlane.f32.xlu0 %v786
        %v812 = vpop.xlane.xlu0 %811
        %813 = vmax.xlane.f32.xlu0 %v787
        %v814 = vpop.xlane.xlu0 %813
        %815 = vmax.xlane.f32.xlu0 %v788
        %v816 = vpop.xlane.xlu0 %815
        %817 = vmax.xlane.f32.xlu0 %v789
        %v818 = vpop.xlane.xlu0 %817
        %819 = vmax.xlane.f32.xlu0 %v790
        %v820 = vpop.xlane.xlu0 %819
        %821 = vmax.xlane.f32.xlu0 %v791
        %v822 = vpop.xlane.xlu0 %821
        %823 = vmax.xlane.f32.xlu0 %v792
        %v824 = vpop.xlane.xlu0 %823
        %v825 = vrcp.pop %v794
        %v826 = vmul.f32 %v794, %v825
        %v827 = vsub.f32 1.0, %v826
        %v828 = vmul.f32 %v825, %v827
        %v829 = vadd.f32 %v825, %v828
        %vm830 = vweird.f32 %v794
        %vm831 = vweird.f32 %v825
        %vm832 = vmor %vm830, %vm831
        %v833 = vsel %vm832, %v825, %v829
        %v834 = vand.u32 2147483647, %v794
        %vm835 = vcmp.eq.f32.partialorder %v834, 8.507059e+37
        %v836 = vand.u32 %v794, 2147483648
        %v837 = vor.u32 1.1754944e-38, %v836
        %v838 = vsel %vm835, %v837, %v833
        %v839 = vrcp.pop %v796
        %v840 = vmul.f32 %v796, %v839
        %v841 = vsub.f32 1.0, %v840
        %v842 = vmul.f32 %v839, %v841
        %v843 = vadd.f32 %v839, %v842
        %vm844 = vweird.f32 %v796
        %vm845 = vweird.f32 %v839
        %vm846 = vmor %vm844, %vm845
        %v847 = vsel %vm846, %v839, %v843
        %v848 = vand.u32 2147483647, %v796
        %vm849 = vcmp.eq.f32.partialorder %v848, 8.507059e+37
        %v850 = vand.u32 %v796, 2147483648
        %v851 = vor.u32 1.1754944e-38, %v850
        %v852 = vsel %vm849, %v851, %v847
        %v853 = vrcp.pop %v798
        %v854 = vmul.f32 %v798, %v853
        %v855 = vsub.f32 1.0, %v854
        %v856 = vmul.f32 %v853, %v855
        %v857 = vadd.f32 %v853, %v856
        %vm858 = vweird.f32 %v798
        %vm859 = vweird.f32 %v853
        %vm860 = vmor %vm858, %vm859
        %v861 = vsel %vm860, %v853, %v857
        %v862 = vand.u32 2147483647, %v798
        %vm863 = vcmp.eq.f32.partialorder %v862, 8.507059e+37
        %v864 = vand.u32 %v798, 2147483648
        %v865 = vor.u32 1.1754944e-38, %v864
        %v866 = vsel %vm863, %v865, %v861
        %v867 = vrcp.pop %v800
        %v868 = vmul.f32 %v800, %v867
        %v869 = vsub.f32 1.0, %v868
        %v870 = vmul.f32 %v867, %v869
        %v871 = vadd.f32 %v867, %v870
        %vm872 = vweird.f32 %v800
        %vm873 = vweird.f32 %v867
        %vm874 = vmor %vm872, %vm873
        %v875 = vsel %vm874, %v867, %v871
        %v876 = vand.u32 2147483647, %v800
        %vm877 = vcmp.eq.f32.partialorder %v876, 8.507059e+37
        %v878 = vand.u32 %v800, 2147483648
        %v879 = vor.u32 1.1754944e-38, %v878
        %v880 = vsel %vm877, %v879, %v875
        %v881 = vrcp.pop %v802
        %v882 = vmul.f32 %v802, %v881
        %v883 = vsub.f32 1.0, %v882
        %v884 = vmul.f32 %v881, %v883
        %v885 = vadd.f32 %v881, %v884
        %vm886 = vweird.f32 %v802
        %vm887 = vweird.f32 %v881
        %vm888 = vmor %vm886, %vm887
        %v889 = vsel %vm888, %v881, %v885
        %v890 = vand.u32 2147483647, %v802
        %vm891 = vcmp.eq.f32.partialorder %v890, 8.507059e+37
        %v892 = vand.u32 %v802, 2147483648
        %v893 = vor.u32 1.1754944e-38, %v892
        %v894 = vsel %vm891, %v893, %v889
        %v895 = vrcp.pop %v804
        %v896 = vmul.f32 %v804, %v895
        %v897 = vsub.f32 1.0, %v896
        %v898 = vmul.f32 %v895, %v897
        %v899 = vadd.f32 %v895, %v898
        %vm900 = vweird.f32 %v804
        %vm901 = vweird.f32 %v895
        %vm902 = vmor %vm900, %vm901
        %v903 = vsel %vm902, %v895, %v899
        %v904 = vand.u32 2147483647, %v804
        %vm905 = vcmp.eq.f32.partialorder %v904, 8.507059e+37
        %v906 = vand.u32 %v804, 2147483648
        %v907 = vor.u32 1.1754944e-38, %v906
        %v908 = vsel %vm905, %v907, %v903
        %v909 = vrcp.pop %v806
        %v910 = vmul.f32 %v806, %v909
        %v911 = vsub.f32 1.0, %v910
        %v912 = vmul.f32 %v909, %v911
        %v913 = vadd.f32 %v909, %v912
        %vm914 = vweird.f32 %v806
        %vm915 = vweird.f32 %v909
        %vm916 = vmor %vm914, %vm915
        %v917 = vsel %vm916, %v909, %v913
        %v918 = vand.u32 2147483647, %v806
        %vm919 = vcmp.eq.f32.partialorder %v918, 8.507059e+37
        %v920 = vand.u32 %v806, 2147483648
        %v921 = vor.u32 1.1754944e-38, %v920
        %v922 = vsel %vm919, %v921, %v917
        %v923 = vrcp.pop %v808
        %v924 = vmul.f32 %v808, %v923
        %v925 = vsub.f32 1.0, %v924
        %v926 = vmul.f32 %v923, %v925
        %v927 = vadd.f32 %v923, %v926
        %vm928 = vweird.f32 %v808
        %vm929 = vweird.f32 %v923
        %vm930 = vmor %vm928, %vm929
        %v931 = vsel %vm930, %v923, %v927
        %v932 = vand.u32 2147483647, %v808
        %vm933 = vcmp.eq.f32.partialorder %v932, 8.507059e+37
        %v934 = vand.u32 %v808, 2147483648
        %v935 = vor.u32 1.1754944e-38, %v934
        %v936 = vsel %vm933, %v935, %v931
        %v937 = vrcp.pop %v810
        %v938 = vmul.f32 %v810, %v937
        %v939 = vsub.f32 1.0, %v938
        %v940 = vmul.f32 %v937, %v939
        %v941 = vadd.f32 %v937, %v940
        %vm942 = vweird.f32 %v810
        %vm943 = vweird.f32 %v937
        %vm944 = vmor %vm942, %vm943
        %v945 = vsel %vm944, %v937, %v941
        %v946 = vand.u32 2147483647, %v810
        %vm947 = vcmp.eq.f32.partialorder %v946, 8.507059e+37
        %v948 = vand.u32 %v810, 2147483648
        %v949 = vor.u32 1.1754944e-38, %v948
        %v950 = vsel %vm947, %v949, %v945
        %v951 = vrcp.pop %v812
        %v952 = vmul.f32 %v812, %v951
        %v953 = vsub.f32 1.0, %v952
        %v954 = vmul.f32 %v951, %v953
        %v955 = vadd.f32 %v951, %v954
        %vm956 = vweird.f32 %v812
        %vm957 = vweird.f32 %v951
        %vm958 = vmor %vm956, %vm957
        %v959 = vsel %vm958, %v951, %v955
        %v960 = vand.u32 2147483647, %v812
        %vm961 = vcmp.eq.f32.partialorder %v960, 8.507059e+37
        %v962 = vand.u32 %v812, 2147483648
        %v963 = vor.u32 1.1754944e-38, %v962
        %v964 = vsel %vm961, %v963, %v959
        %v965 = vrcp.pop %v814
        %v966 = vmul.f32 %v814, %v965
        %v967 = vsub.f32 1.0, %v966
        %v968 = vmul.f32 %v965, %v967
        %v969 = vadd.f32 %v965, %v968
        %vm970 = vweird.f32 %v814
        %vm971 = vweird.f32 %v965
        %vm972 = vmor %vm970, %vm971
        %v973 = vsel %vm972, %v965, %v969
        %v974 = vand.u32 2147483647, %v814
        %vm975 = vcmp.eq.f32.partialorder %v974, 8.507059e+37
        %v976 = vand.u32 %v814, 2147483648
        %v977 = vor.u32 1.1754944e-38, %v976
        %v978 = vsel %vm975, %v977, %v973
        %v979 = vrcp.pop %v816
        %v980 = vmul.f32 %v816, %v979
        %v981 = vsub.f32 1.0, %v980
        %v982 = vmul.f32 %v979, %v981
        %v983 = vadd.f32 %v979, %v982
        %vm984 = vweird.f32 %v816
        %vm985 = vweird.f32 %v979
        %vm986 = vmor %vm984, %vm985
        %v987 = vsel %vm986, %v979, %v983
        %v988 = vand.u32 2147483647, %v816
        %vm989 = vcmp.eq.f32.partialorder %v988, 8.507059e+37
        %v990 = vand.u32 %v816, 2147483648
        %v991 = vor.u32 1.1754944e-38, %v990
        %v992 = vsel %vm989, %v991, %v987
        %v993 = vrcp.pop %v818
        %v994 = vmul.f32 %v818, %v993
        %v995 = vsub.f32 1.0, %v994
        %v996 = vmul.f32 %v993, %v995
        %v997 = vadd.f32 %v993, %v996
        %vm998 = vweird.f32 %v818
        %vm999 = vweird.f32 %v993
        %vm1000 = vmor %vm998, %vm999
        %v1001 = vsel %vm1000, %v993, %v997
        %v1002 = vand.u32 2147483647, %v818
        %vm1003 = vcmp.eq.f32.partialorder %v1002, 8.507059e+37
        %v1004 = vand.u32 %v818, 2147483648
        %v1005 = vor.u32 1.1754944e-38, %v1004
        %v1006 = vsel %vm1003, %v1005, %v1001
        %v1007 = vrcp.pop %v820
        %v1008 = vmul.f32 %v820, %v1007
        %v1009 = vsub.f32 1.0, %v1008
        %v1010 = vmul.f32 %v1007, %v1009
        %v1011 = vadd.f32 %v1007, %v1010
        %vm1012 = vweird.f32 %v820
        %vm1013 = vweird.f32 %v1007
        %vm1014 = vmor %vm1012, %vm1013
        %v1015 = vsel %vm1014, %v1007, %v1011
        %v1016 = vand.u32 2147483647, %v820
        %vm1017 = vcmp.eq.f32.partialorder %v1016, 8.507059e+37
        %v1018 = vand.u32 %v820, 2147483648
        %v1019 = vor.u32 1.1754944e-38, %v1018
        %v1020 = vsel %vm1017, %v1019, %v1015
        %v1021 = vrcp.pop %v822
        %v1022 = vmul.f32 %v822, %v1021
        %v1023 = vsub.f32 1.0, %v1022
        %v1024 = vmul.f32 %v1021, %v1023
        %v1025 = vadd.f32 %v1021, %v1024
        %vm1026 = vweird.f32 %v822
        %vm1027 = vweird.f32 %v1021
        %vm1028 = vmor %vm1026, %vm1027
        %v1029 = vsel %vm1028, %v1021, %v1025
        %v1030 = vand.u32 2147483647, %v822
        %vm1031 = vcmp.eq.f32.partialorder %v1030, 8.507059e+37
        %v1032 = vand.u32 %v822, 2147483648
        %v1033 = vor.u32 1.1754944e-38, %v1032
        %v1034 = vsel %vm1031, %v1033, %v1029
        %v1035 = vrcp.pop %v824
        %v1036 = vmul.f32 %v824, %v1035
        %v1037 = vsub.f32 1.0, %v1036
        %v1038 = vmul.f32 %v1035, %v1037
        %v1039 = vadd.f32 %v1035, %v1038
        %vm1040 = vweird.f32 %v824
        %vm1041 = vweird.f32 %v1035
        %vm1042 = vmor %vm1040, %vm1041
        %v1043 = vsel %vm1042, %v1035, %v1039
        %v1044 = vand.u32 2147483647, %v824
        %vm1045 = vcmp.eq.f32.partialorder %v1044, 8.507059e+37
        %v1046 = vand.u32 %v824, 2147483648
        %v1047 = vor.u32 1.1754944e-38, %v1046
        %v1048 = vsel %vm1045, %v1047, %v1043
        %v1049 = vmul.f32 %v761, %v838
        %v1050 = vmul.f32 %v762, %v852
        %v1051 = vmul.f32 %v763, %v866
        %v1052 = vmul.f32 %v764, %v880
        %v1053 = vmul.f32 %v765, %v894
        %v1054 = vmul.f32 %v766, %v908
        %v1055 = vmul.f32 %v767, %v922
        %v1056 = vmul.f32 %v768, %v936
        %v1057 = vmul.f32 %v769, %v950
        %v1058 = vmul.f32 %v770, %v964
        %v1059 = vmul.f32 %v771, %v978
        %v1060 = vmul.f32 %v772, %v992
        %v1061 = vmul.f32 %v773, %v1006
        %v1062 = vmul.f32 %v774, %v1020
        %v1063 = vmul.f32 %v775, %v1034
        %v1064 = vmul.f32 %v776, %v1048
        %1065 = vst [vmem:[%s180] sm:$0xff] %v1049
        %1066 = vst [vmem:[%s180 + $0x8] sm:$0xff] %v1050
        %1067 = vst [vmem:[%s180 + $0x10] sm:$0xff] %v1051
        %1068 = vst [vmem:[%s180 + $0x18] sm:$0xff] %v1052
        %1069 = vst [vmem:[%s180 + $0x20] sm:$0xff] %v1053
        %1070 = vst [vmem:[%s180 + $0x28] sm:$0xff] %v1054
        %1071 = vst [vmem:[%s180 + $0x30] sm:$0xff] %v1055
        %1072 = vst [vmem:[%s180 + $0x38] sm:$0xff] %v1056
        %1073 = vst [vmem:[%s180 + $0x40] sm:$0xff] %v1057
        %1074 = vst [vmem:[%s180 + $0x48] sm:$0xff] %v1058
        %1075 = vst [vmem:[%s180 + $0x50] sm:$0xff] %v1059
        %1076 = vst [vmem:[%s180 + $0x58] sm:$0xff] %v1060
        %1077 = vst [vmem:[%s180 + $0x60] sm:$0xff] %v1061
        %1078 = vst [vmem:[%s180 + $0x68] sm:$0xff] %v1062
        %1079 = vst [vmem:[%s180 + $0x70] sm:$0xff] %v1063
        %1080 = vst [vmem:[%s180 + $0x78] sm:$0xff] %v1064
        %s1081 = sand.u32 %s75, 1
        %s1082 = scalar_lea.sflag [#allocation4], %s1081
        %s1083 = sand.u32 %s75, 1
        %s1084 = smul.addr %s1083, 128
        %s1085 = scalar_lea.vmem [#allocation7], %s1084
        // Predicated region
        $region37: #{tpu_custom_call.1} parent=27 // pred_check
          %p1086 = pneg %p85
        $region38: #{tpu_custom_call.1} parent=27 // pred_check_branch
          %1088 = sbr.rel (%p1086) target = $region40
        $region39: #{tpu_custom_call.1} parent=27 // pred_region
          %s1089 = smul.u32 16, %s20
          %1091 = vsyncadd %s1082, 0
          %s1092 = smul.addr %s1089, 8
          %s1093 = scalar_lea.hbm %s2, %s1092
          %s1094 = sshll.u32 %s1085, 4
          %s1095 = int_to_ptr.vmem [resolvable:$true] %s1094
          %s1096 = sshll.u32 %s1093, 4
          %s1097 = int_to_ptr.hbm [resolvable:$true] %s1096
          %1102 = dma.vmem_to_hbm [thread:$0]  %s1095, 2048, %s1097, %s1082, 128, 128, 8
        $region40: #{tpu_custom_call.1} parent=27 // pred_fallthru
          _
      $region28: #{tpu_custom_call.1} parent=5 // pred_fallthru
        _
      %p1103 = scmp.le.s32.totalorder 2, %s15
      // Predicated region
      $region41: #{tpu_custom_call.1} parent=5 // pred_check
        %p1104 = pneg %p1103
      $region42: #{tpu_custom_call.1} parent=5 // pred_check_branch
        %1106 = sbr.rel (%p1104) target = $region44
      $region43: #{tpu_custom_call.1} parent=5 // pred_region
        %s1107 = ssub.s32 %s15, 2
        // Predicated region
        $region45: #{tpu_custom_call.1} parent=43 // pred_check
          %p1108 = pneg %p91
        $region46: #{tpu_custom_call.1} parent=43 // pred_check_branch
          %1110 = sbr.rel (%p1108) target = $region48
        $region47: #{tpu_custom_call.1} parent=43 // pred_region
          %s1111 = sand.u32 %s76, 1
          %s1112 = scalar_lea.sflag [#allocation4], %s1111
          %s1113 = sand.u32 %s76, 1
          %s1114 = smul.addr %s1113, 128
          %s1115 = scalar_lea.vmem [#allocation7], %s1114
          %1117 = dma.done %s1112, 2048
        $region48: #{tpu_custom_call.1} parent=43 // pred_fallthru
          _
      $region44: #{tpu_custom_call.1} parent=5 // pred_fallthru
        _
    $region6: #{tpu_custom_call.1} parent=1 // loop_footer
      %s19 = sadd.s32 1, %s15
    $region7: #{tpu_custom_call.1} parent=1 // loop_footer_branch
      %14 = sbr.rel target = $region3
    $region8: #{tpu_custom_call.1} parent=1 // loop_exit
      _
    %1118 = vsyncpa [#allocation3], 1
    %s1119 = scalar_lea.sflag [#allocation3], 1
    %1120 = vsyncpa %s1119, 1
    %1121 = vsyncpa [#allocation6], 1
    %1122 = vsyncpa [#allocation4], 1
    %s1123 = scalar_lea.sflag [#allocation4], 1
    %1124 = vsyncpa %s1123, 1

</llo_original>
